<compile_context>
chip_gen: v6e
topology: v6e:2x2x1
jax: 0.10.0
libtpu: 0.0.40
codegen_flags: <defaults>
</compile_context>

<pallas_src>
from functools import partial
from math import sqrt

import jax
import jax.numpy as jnp
from jax.experimental import pallas as pl
from jax.experimental.pallas import tpu as pltpu


def _round_up(v, m):
    return ((v + m - 1) // m) * m


def rff_kernel(x_ref, wt_ref, b_ref, o_ref, *, scale):
    # x_ref:  (TM, TK) bf16  batch x K tile
    # wt_ref: (TK, TN) bf16  K x dim_out tile (pre-transposed weights)
    # b_ref:  (1,  TN) f32   bias tile (K-invariant block -> no re-DMA over K)
    # o_ref:  (TM, TN) f32   output tile; its block index is K-invariant, so it
    #                        stays resident across K and doubles as the f32 acc.
    k = pl.program_id(2)

    @pl.when(k == 0)
    def _init():
        o_ref[...] = jnp.zeros_like(o_ref)

    # bf16 x bf16 -> f32 on the MXU, accumulated into the resident f32 output.
    o_ref[...] += jnp.dot(x_ref[...], wt_ref[...],
                          preferred_element_type=jnp.float32)

    @pl.when(k == pl.num_programs(2) - 1)
    def _finalize():
        # Bias + cos + sqrt(2/dim_out) epilogue, all in f32.
        o_ref[...] = scale * jnp.cos(o_ref[...] + b_ref[...])


def prepare_rff_params(w, b, *, tn=1024, tk=2048):
    """One-time preparation of the fixed RFF buffers (hoisted out of the
    per-call path): transpose to (dim_in, dim_out), cast to bf16, pad to tile
    multiples.  Returns (w_t_padded, bias_padded, meta)."""
    dim_out, dim_in = w.shape
    tn = min(tn, _round_up(dim_out, 128))
    tk = min(tk, _round_up(dim_in, 128))
    npad = _round_up(dim_out, tn)
    kpad = _round_up(dim_in, tk)

    wt = w.astype(jnp.bfloat16).T                       # (dim_in, dim_out)
    if (kpad, npad) != wt.shape:
        wt = jnp.pad(wt, ((0, kpad - dim_in), (0, npad - dim_out)))
    bp = b.astype(jnp.float32)
    if npad != dim_out:
        bp = jnp.pad(bp, (0, npad - dim_out))
    bp = bp.reshape(1, npad)
    return wt, bp, (dim_out, dim_in, tn, tk)


def rff_forward(x, wt, bp, meta, *, tm=512):
    """JAX wrapper mirroring RffLayer.forward, using pre-prepared weights."""
    dim_out, dim_in, tn, tk = meta
    kpad, npad = wt.shape
    batch = x.shape[0]
    assert x.shape[1] == dim_in

    mp8 = _round_up(batch, 8)
    tm = min(tm, mp8)

    # v7x has 2 TensorCores sharded over the "parallel" grid axes: avoid a
    # 1x1 parallel grid when the batch is big enough to split (harmless on
    # single-TC v5e/v6e).
    if npad // tn == 1 and mp8 // tm == 1 and mp8 >= 16:
        tm = _round_up(-(-mp8 // 2), 8)

    mp = _round_up(batch, tm)

    # Only x is padded / cast per call; skipped entirely when already aligned.
    x_p = x.astype(jnp.bfloat16)
    if (mp, kpad) != x_p.shape:
        x_p = jnp.pad(x_p, ((0, mp - batch), (0, kpad - dim_in)))

    grid = (mp // tm, npad // tn, kpad // tk)
    kernel = partial(rff_kernel, scale=sqrt(2.0 / dim_out))

    out_p = pl.pallas_call(
        kernel,
        out_shape=jax.ShapeDtypeStruct((mp, npad), jnp.float32),
        grid_spec=pltpu.PrefetchScalarGridSpec(
            num_scalar_prefetch=0,
            grid=grid,
            in_specs=[
                pl.BlockSpec((tm, tk), lambda i, j, k: (i, k)),   # x (bf16)
                pl.BlockSpec((tk, tn), lambda i, j, k: (k, j)),   # w^T (bf16)
                pl.BlockSpec((1, tn), lambda i, j, k: (0, j)),    # bias (f32)
            ],
            out_specs=pl.BlockSpec((tm, tn), lambda i, j, k: (i, j)),
        ),
        compiler_params=pltpu.CompilerParams(
            dimension_semantics=("parallel", "parallel", "arbitrary"),
            # Big enough for the double-buffered 512x1024x2048 bf16 tiles on
            # v5e/v6e (128 MiB physical) while staying under v7x's 64 MiB.
            vmem_limit_bytes=48 * 1024 * 1024,
        ),
        cost_estimate=pl.CostEstimate(
            flops=2 * mp * npad * kpad,
            transcendentals=mp * npad,                  # cos epilogue
            bytes_accessed=(
                (mp // tm) * kpad * npad * 2            # w^T streamed per M tile
                + (npad // tn) * mp * kpad * 2          # x streamed per N tile
                + mp * npad * 4                         # output write
                + npad * 4),                            # bias
        ),
    )(x_p, wt, bp)

    return out_p[:batch, :dim_out]


if __name__ == "__main__":
    # Small shapes consistent with the module: x is (batch, dim_in).
    batch, dim_in, dim_out = 8, 32, 64

    key = jax.random.PRNGKey(0)
    k_w, k_b, k_x = jax.random.split(key, 3)

    # sample_features(): w ~ N(0,1), b ~ N(0,1)  (fixed buffers)
    w = jax.random.normal(k_w, (dim_out, dim_in), dtype=jnp.float32)
    b = jax.random.normal(k_b, (dim_out,), dtype=jnp.float32)
    x = jax.random.normal(k_x, (batch, dim_in), dtype=jnp.float32)

    # Prepare the fixed parameters once (outside the per-call path).
    wt, bp, meta = prepare_rff_params(w, b)

    out = rff_forward(x, wt, bp, meta)
    out = jax.block_until_ready(out)

    scale = sqrt(2.0 / dim_out)
    # Tight reference with the same bf16 rounding of the matmul inputs.
    xb = x.astype(jnp.bfloat16).astype(jnp.float32)
    wb = w.astype(jnp.bfloat16).astype(jnp.float32)
    ref_bf16 = scale * jnp.cos(
        jnp.dot(xb, wb.T, precision=jax.lax.Precision.HIGHEST) + b)
    # Exact f32 reference (loose check of the bf16-input approximation).
    ref_f32 = scale * jnp.cos(
        jnp.dot(x, w.T, precision=jax.lax.Precision.HIGHEST) + b)

    assert out.shape == (batch, dim_out)
    assert jnp.allclose(out, ref_bf16, atol=1e-4, rtol=1e-4), \
        float(jnp.max(jnp.abs(out - ref_bf16)))
    assert jnp.allclose(out, ref_f32, atol=1e-1, rtol=1e-1), \
        float(jnp.max(jnp.abs(out - ref_f32)))

    print("KERNEL_OK")
</pallas_src>

<mosaic_0001>
module attributes {stable_mosaic.version = 11 : i64} {
  func.func @rff_kernel(%arg0: i32, %arg1: i32, %arg2: i32, %arg3: memref<8x128xbf16, #tpu.memory_space<vmem>>, %arg4: memref<128x128xbf16, #tpu.memory_space<vmem>>, %arg5: memref<1x128xf32, #tpu.memory_space<vmem>>, %arg6: memref<8x128xf32, #tpu.memory_space<vmem>>) attributes {dimension_semantics = [#tpu.dimension_semantics<parallel>, #tpu.dimension_semantics<parallel>, #tpu.dimension_semantics<arbitrary>], iteration_bounds = array<i64: 1, 1, 1>, scalar_prefetch = 0 : i64, scratch_operands = 0 : i64, tpu.core_type = #tpu.core_type<tc>, window_params = [{transform_indices = @transform_0, window_bounds = array<i64: 8, 128>}, {transform_indices = @transform_1, window_bounds = array<i64: 128, 128>}, {transform_indices = @transform_2, window_bounds = array<i64: 1, 128>}, {transform_indices = @transform_3, window_bounds = array<i64: 8, 128>}]} {
    %c0_i32 = arith.constant 0 : i32
    %0 = arith.cmpi eq, %arg2, %c0_i32 : i32
    %1 = arith.extui %0 : i1 to i32
    %c0_i32_0 = arith.constant 0 : i32
    %2 = arith.cmpi ne, %1, %c0_i32_0 : i32
    scf.if %2 {
      %cst_10 = arith.constant 0.000000e+00 : f32
      %12 = vector.broadcast %cst_10 : f32 to vector<8x128xf32>
      %c0_11 = arith.constant 0 : index
      %c0_12 = arith.constant 0 : index
      %13 = vector.load %arg6[%c0_11, %c0_12] : memref<8x128xf32, #tpu.memory_space<vmem>>, vector<8x128xf32>
      tpu.vector_store %arg6[%c0_11, %c0_12], %12 {strides = array<i32>} : memref<8x128xf32, #tpu.memory_space<vmem>>, vector<8x128xf32>,
    } else {
    }
    %c0 = arith.constant 0 : index
    %c0_1 = arith.constant 0 : index
    %3 = vector.load %arg6[%c0, %c0_1] : memref<8x128xf32, #tpu.memory_space<vmem>>, vector<8x128xf32>
    %c0_2 = arith.constant 0 : index
    %c0_3 = arith.constant 0 : index
    %4 = vector.load %arg3[%c0_2, %c0_3] : memref<8x128xbf16, #tpu.memory_space<vmem>>, vector<8x128xbf16>
    %c0_4 = arith.constant 0 : index
    %c0_5 = arith.constant 0 : index
    %5 = vector.load %arg4[%c0_4, %c0_5] : memref<128x128xbf16, #tpu.memory_space<vmem>>, vector<128x128xbf16>
    %cst = arith.constant dense<0.000000e+00> : vector<8x128xf32>
    %6 = tpu.matmul %4, %5, %cst {dimension_numbers = #tpu.dot_dimension_numbers<[1], [0], [0], [1], [0, 0, 1, 1], [], []>} : vector<8x128xbf16>, vector<128x128xbf16>, vector<8x128xf32> -> vector<8x128xf32>
    %7 = arith.addf %3, %6 : vector<8x128xf32>
    %c0_6 = arith.constant 0 : index
    %c0_7 = arith.constant 0 : index
    %8 = vector.load %arg6[%c0_6, %c0_7] : memref<8x128xf32, #tpu.memory_space<vmem>>, vector<8x128xf32>
    tpu.vector_store %arg6[%c0_6, %c0_7], %7 {strides = array<i32>} : memref<8x128xf32, #tpu.memory_space<vmem>>, vector<8x128xf32>,
    %c0_i32_8 = arith.constant 0 : i32
    %9 = arith.cmpi eq, %arg2, %c0_i32_8 : i32
    %10 = arith.extui %9 : i1 to i32
    %c0_i32_9 = arith.constant 0 : i32
    %11 = arith.cmpi ne, %10, %c0_i32_9 : i32
    scf.if %11 {
      %c0_10 = arith.constant 0 : index
      %c0_11 = arith.constant 0 : index
      %12 = vector.load %arg6[%c0_10, %c0_11] : memref<8x128xf32, #tpu.memory_space<vmem>>, vector<8x128xf32>
      %c0_12 = arith.constant 0 : index
      %c0_13 = arith.constant 0 : index
      %13 = vector.load %arg5[%c0_12, %c0_13] : memref<1x128xf32, #tpu.memory_space<vmem>>, vector<1x128xf32>
      %14 = vector.broadcast %13 : vector<1x128xf32> to vector<8x128xf32>
      %15 = arith.addf %12, %14 : vector<8x128xf32>
      %16 = math.cos %15 : vector<8x128xf32>
      %cst_14 = arith.constant 0.176776692 : f32
      %17 = vector.broadcast %cst_14 : f32 to vector<8x128xf32>
      %18 = arith.mulf %17, %16 : vector<8x128xf32>
      %c0_15 = arith.constant 0 : index
      %c0_16 = arith.constant 0 : index
      %19 = vector.load %arg6[%c0_15, %c0_16] : memref<8x128xf32, #tpu.memory_space<vmem>>, vector<8x128xf32>
      tpu.vector_store %arg6[%c0_15, %c0_16], %18 {strides = array<i32>} : memref<8x128xf32, #tpu.memory_space<vmem>>, vector<8x128xf32>,
    } else {
    }
    return
  }
  func.func @transform_0(%arg0: i32, %arg1: i32, %arg2: i32) -> (i32, i32) {
    %c0_i32 = arith.constant 0 : i32
    return %arg0, %arg2 : i32, i32
  }
  func.func @transform_1(%arg0: i32, %arg1: i32, %arg2: i32) -> (i32, i32) {
    %c0_i32 = arith.constant 0 : i32
    return %arg2, %arg1 : i32, i32
  }
  func.func @transform_2(%arg0: i32, %arg1: i32, %arg2: i32) -> (i32, i32) {
    %c0_i32 = arith.constant 0 : i32
    %c0_i32_0 = arith.constant 0 : i32
    return %c0_i32, %arg1 : i32, i32
  }
  func.func @transform_3(%arg0: i32, %arg1: i32, %arg2: i32) -> (i32, i32) {
    %c0_i32 = arith.constant 0 : i32
    return %arg0, %arg1 : i32, i32
  }
}

</mosaic_0001>

<llo_original>
// kernel: tpu_custom_call.1
$region0: #{tpu_custom_call.1}
  #allocation0 [shape = 'u32[]', space=smem, size = 0x4, offset = 0x4, fixed_abs, tag = 'smem constant byte address 0x4 - core index']
  #allocation1 [shape = 'u32[144,128]{1,0:T(1,128)}', space=vmem, size = 0x12000, scoped, tag = 'internal scratch']
  %s0 = inlined_call_operand.hbm [shape: bf16[8,128], index: 0, kind: input, shape index: {}]
  %s1 = inlined_call_operand.hbm [shape: bf16[128,128], index: 1, kind: input, shape index: {}]
  %s2 = inlined_call_operand.vmem [shape: f32[1,128], index: 2, kind: input, shape index: {}]
  %s3 = inlined_call_operand.hbm [shape: f32[8,128], index: 3, kind: output, shape index: {}]
  %s4 = sld [smem:[#allocation0]]
  $region38: #{tpu_custom_call.1} parent=0
    _
  %s6 = ssub.s32 1, %s4
  %s7 = scalar_select 0, %s6, %s4
  $region1: #{tpu_custom_call.1} parent=0
    #allocation2 [shape = 'u8[2048]{0}', space=vmem, size = 0x800, scoped, tag = 'input window, operand 0, single buffered']
    #allocation3 [shape = 's32[1]{0}', space=sflag, size = 0x4, scoped, tag = 'scoped memory for tpu_custom_call.1']
    #allocation4 [shape = 's32[1]{0}', space=sflag, size = 0x4, scoped, tag = 'scoped memory for tpu_custom_call.1']
    #allocation5 [shape = 'u8[32768]{0}', space=vmem, size = 0x8000, scoped, tag = 'input window, operand 1, single buffered']
    #allocation6 [shape = 's32[1]{0}', space=sflag, size = 0x4, scoped, tag = 'scoped memory for tpu_custom_call.1']
    #allocation7 [shape = 'u8[4096]{0}', space=vmem, size = 0x1000, scoped, tag = 'output window, operand 0, single buffered']
    %8 = vsyncpa [#allocation3], 0
    %9 = vsyncpa [#allocation6], 0
    %10 = vsyncpa [#allocation4], 0
    // Predicated region
    $region2: #{tpu_custom_call.1} parent=1 // pred_check
      _
    $region3: #{tpu_custom_call.1} parent=1 // pred_check_branch
      %12 = sbr.rel (0) target = $region5
    $region4: #{tpu_custom_call.1} parent=1 // pred_region
      %s14 = ssub.s32 64, 64
      %15 = vsyncadd [#allocation3], %s14
      %s17 = sshll.u32 [#allocation2], 4
      %s18 = int_to_ptr.vmem [resolvable:$true] %s17
      %20 = dma.hbm_to_vmem [thread:$0]  %s0, 64, %s18, [#allocation3]
    $region5: #{tpu_custom_call.1} parent=1 // pred_fallthru
      _
    // Predicated region
    $region6: #{tpu_custom_call.1} parent=1 // pred_check
      _
    $region7: #{tpu_custom_call.1} parent=1 // pred_check_branch
      %22 = sbr.rel (0) target = $region9
    $region8: #{tpu_custom_call.1} parent=1 // pred_region
      %s24 = ssub.s32 1024, 1024
      %25 = vsyncadd [#allocation6], %s24
      %s26 = sshll.u32 [#allocation5], 4
      %s27 = int_to_ptr.vmem [resolvable:$true] %s26
      %32 = dma.hbm_to_vmem [thread:$0]  %s1, 1024, %s27, [#allocation6], 64, 64, 4
    $region9: #{tpu_custom_call.1} parent=1 // pred_fallthru
      _
    // Predicated region
    $region10: #{tpu_custom_call.1} parent=1 // pred_check
      _
    $region11: #{tpu_custom_call.1} parent=1 // pred_check_branch
      %34 = sbr.rel (0) target = $region13
    $region12: #{tpu_custom_call.1} parent=1 // pred_region
      _
    $region13: #{tpu_custom_call.1} parent=1 // pred_fallthru
      _
    // Predicated region
    $region14: #{tpu_custom_call.1} parent=1 // pred_check
      _
    $region15: #{tpu_custom_call.1} parent=1 // pred_check_branch
      %36 = sbr.rel (0) target = $region17
    $region16: #{tpu_custom_call.1} parent=1 // pred_region
      %37 = dma.done [#allocation3], 64
    $region17: #{tpu_custom_call.1} parent=1 // pred_fallthru
      _
    // Predicated region
    $region18: #{tpu_custom_call.1} parent=1 // pred_check
      _
    $region19: #{tpu_custom_call.1} parent=1 // pred_check_branch
      %39 = sbr.rel (0) target = $region21
    $region20: #{tpu_custom_call.1} parent=1 // pred_region
      %40 = dma.done [#allocation6], 1024
    $region21: #{tpu_custom_call.1} parent=1 // pred_fallthru
      _
    %p42 = scmp.eq.s32.totalorder 0, 0
    // Predicated region
    $region22: #{tpu_custom_call.1} parent=1 // pred_check
      %p43 = pneg %p42
    $region23: #{tpu_custom_call.1} parent=1 // pred_check_branch
      %45 = sbr.rel (%p43) target = $region25
    $region24: #{tpu_custom_call.1} parent=1 // pred_region
      %46 = vst [vmem:[#allocation7] sm:$0xff] 0.0
    $region25: #{tpu_custom_call.1} parent=1 // pred_fallthru
      _
    %v47 = vld [vmem:[#allocation7] sm:$0xff]
    %v48 = vld [vmem:[#allocation2] sm:$0xf]
    %v49 = vld [vmem:[#allocation5] sm:$0xf]
    %v50 = vld [vmem:[#allocation5 + $0x4] sm:$0xf]
    %v51 = vld [vmem:[#allocation5 + $0x8] sm:$0xf]
    %v52 = vld [vmem:[#allocation5 + $0xc] sm:$0xf]
    %v53 = vld [vmem:[#allocation5 + $0x10] sm:$0xf]
    %v54 = vld [vmem:[#allocation5 + $0x14] sm:$0xf]
    %v55 = vld [vmem:[#allocation5 + $0x18] sm:$0xf]
    %v56 = vld [vmem:[#allocation5 + $0x1c] sm:$0xf]
    %v57 = vld [vmem:[#allocation5 + $0x20] sm:$0xf]
    %v58 = vld [vmem:[#allocation5 + $0x24] sm:$0xf]
    %v59 = vld [vmem:[#allocation5 + $0x28] sm:$0xf]
    %v60 = vld [vmem:[#allocation5 + $0x2c] sm:$0xf]
    %v61 = vld [vmem:[#allocation5 + $0x30] sm:$0xf]
    %v62 = vld [vmem:[#allocation5 + $0x34] sm:$0xf]
    %v63 = vld [vmem:[#allocation5 + $0x38] sm:$0xf]
    %v64 = vld [vmem:[#allocation5 + $0x3c] sm:$0xf]
    %v81 = vunpack.c.l.b16 %v49
    %v82 = vunpack.c.l.b16 %v50
    %v83 = vunpack.c.l.b16 %v51
    %v84 = vunpack.c.l.b16 %v52
    %v85 = vunpack.c.l.b16 %v53
    %v86 = vunpack.c.l.b16 %v54
    %v87 = vunpack.c.l.b16 %v55
    %v88 = vunpack.c.l.b16 %v56
    %v89 = vunpack.c.l.b16 %v57
    %v90 = vunpack.c.l.b16 %v58
    %v91 = vunpack.c.l.b16 %v59
    %v92 = vunpack.c.l.b16 %v60
    %v93 = vunpack.c.l.b16 %v61
    %v94 = vunpack.c.l.b16 %v62
    %v95 = vunpack.c.l.b16 %v63
    %v96 = vunpack.c.l.b16 %v64
    %v97 = vpack.c.b16 %v82, %v81
    %v98 = vpack.c.b16 %v84, %v83
    %v99 = vpack.c.b16 %v86, %v85
    %v100 = vpack.c.b16 %v88, %v87
    %v101 = vpack.c.b16 %v90, %v89
    %v102 = vpack.c.b16 %v92, %v91
    %v103 = vpack.c.b16 %v94, %v93
    %v104 = vpack.c.b16 %v96, %v95
    %113 = vmatprep.subr.bf16.mxu0 0
    %114 = vmatpush1.bf16.msra.mxu0 %v104
    %115 = vmatprep.subr.bf16.mxu0 0
    %116 = vmatpush1.bf16.msra.mxu0 %v103
    %117 = vmatprep.subr.bf16.mxu0 0
    %118 = vmatpush1.bf16.msra.mxu0 %v102
    %119 = vmatprep.subr.bf16.mxu0 0
    %120 = vmatpush1.bf16.msra.mxu0 %v101
    %121 = vmatprep.subr.bf16.mxu0 0
    %122 = vmatpush1.bf16.msra.mxu0 %v100
    %123 = vmatprep.subr.bf16.mxu0 0
    %124 = vmatpush1.bf16.msra.mxu0 %v99
    %125 = vmatprep.subr.bf16.mxu0 0
    %126 = vmatpush1.bf16.msra.mxu0 %v98
    %127 = vmatprep.subr.bf16.mxu0 0
    %128 = vmatpush1.bf16.msra.mxu0 %v97
    %129 = vmatprep.subr.bf16.mxu0 0
    %130 = vmatpush2.bf16.msra.mxu0 0
    %131 = vmatprep.subr.bf16.mxu0 0
    %132 = vmatpush2.bf16.msra.mxu0 0
    %133 = vmatprep.subr.bf16.mxu0 0
    %134 = vmatpush2.bf16.msra.mxu0 0
    %135 = vmatprep.subr.bf16.mxu0 0
    %136 = vmatpush2.bf16.msra.mxu0 0
    %137 = vmatprep.subr.bf16.mxu0 0
    %138 = vmatpush2.bf16.msra.mxu0 0
    %139 = vmatprep.subr.bf16.mxu0 0
    %140 = vmatpush2.bf16.msra.mxu0 0
    %141 = vmatprep.subr.bf16.mxu0 0
    %142 = vmatpush2.bf16.msra.mxu0 0
    %143 = vmatprep.subr.bf16.mxu0 0
    %144 = vmatpush2.bf16.msra.mxu0 0
    %145 = vmatprep.mubr.bf16.mxu0 0
    %146 = vmatmul.mubr.bf16.gmra.mxu0 %v48
    %v147 = vpop.f32.mrf.mxu0
    %v148 = vadd.f32 0.0, %v147
    %v149 = vpop.f32.mrf.mxu0
    %v150 = vpop.f32.mrf.mxu0
    %v151 = vpop.f32.mrf.mxu0
    %152 = vdwg.mxu0
    %v153 = vadd.f32 %v47, %v148
    %154 = vst [vmem:[#allocation7] sm:$0xff] %v153
    // Predicated region
    $region26: #{tpu_custom_call.1} parent=1 // pred_check
      %p155 = pneg %p42
    $region27: #{tpu_custom_call.1} parent=1 // pred_check_branch
      %157 = sbr.rel (%p155) target = $region29
    $region28: #{tpu_custom_call.1} parent=1 // pred_region
      %v158 = vld [vmem:[#allocation7] sm:$0xff]
      %v159 = vld [vmem:[%s2] sm:$0x1]
      %v161 = vlaneseq
      %v162 = vshrl.u32 %v161, 7
      %v163 = vsub.s32 0, %v162
      %v164 = vrot.slane %v159, %v163
      %v166 = vadd.f32 %v158, %v164
      %v167 = vand.u32 2147483647, %v166
      %vm168 = vcmp.le.f32.partialorder %v167, 0.7853982
      %vm169 = vcmp.lt.s32.totalorder %v166, 0
      %v170 = vand.u32 %v166, 2139095040
      %v171 = vshrl.u32 %v170, 23
      %v172 = vsub.s32 %v171, 127
      %v173 = vand.u32 2147483647, %v166
      %v174 = vand.u32 %v173, 8388607
      %v175 = vor.u32 %v174, 8388608
      %v176 = vsub.s32 0, %v175
      %v177 = vadd.s32 %v172, 1
      %vm178 = vcmp.gt.s32.totalorder %v177, 0
      %v179 = vsel %vm178, %v177, 0
      %v180 = vshrl.u32 %v179, 5
      %v181 = vand.u32 %v179, 31
      %v182 = vsub.s32 32, %v181
      %v183 = vshrl.u32 683565275, %v182
      %v184 = vshll.u32 683565275, %v181
      %v185 = vshrl.u32 2475754826, %v182
      %v186 = vor.u32 %v184, %v185
      %v187 = vshll.u32 2475754826, %v181
      %v188 = vshrl.u32 2131351028, %v182
      %v189 = vor.u32 %v187, %v188
      %v190 = vshll.u32 2131351028, %v181
      %v191 = vshrl.u32 2102212464, %v182
      %v192 = vor.u32 %v190, %v191
      %v193 = vshll.u32 2102212464, %v181
      %v194 = vshrl.u32 920167782, %v182
      %v195 = vor.u32 %v193, %v194
      %v196 = vshll.u32 920167782, %v181
      %v197 = vshrl.u32 1326507024, %v182
      %v198 = vor.u32 %v196, %v197
      %vm199 = vcmp.lt.s32.totalorder %v180, 1
      %vm200 = vcmp.lt.s32.totalorder %v180, 2
      %vm201 = vcmp.lt.s32.totalorder %v180, 3
      %vm202 = vcmp.lt.s32.totalorder %v180, 4
      %v203 = vsel %vm199, %v183, %v186
      %v204 = vsel %vm202, %v192, 2102212464
      %v205 = vsel %vm201, %v189, %v204
      %v206 = vsel %vm200, %v203, %v205
      %v207 = vsel %vm199, %v186, %v189
      %v208 = vsel %vm202, %v195, 920167782
      %v209 = vsel %vm201, %v192, %v208
      %v210 = vsel %vm200, %v207, %v209
      %v211 = vsel %vm199, %v189, %v192
      %v212 = vsel %vm202, %v198, 1326507024
      %v213 = vsel %vm201, %v195, %v212
      %v214 = vsel %vm200, %v211, %v213
      %v215 = vshll.u32 %v175, 8
      %v216 = vmul.u32.u64.compose %v215, %v214
      %v217 = vextract.low.u32 %v216
      %v218 = vextract.high.u32 %v216
      %v219 = vmul.u32.u64.compose %v215, %v210
      %v220 = vextract.low.u32 %v219
      %v221 = vextract.high.u32 %v219
      %v222 = vmul.u32 %v215, %v206
      %v223 = vadd.s32 %v218, %v220
      %vm224 = vc.u32 %v218, %v220
      %v225 = vadd.s32 %v221, 1
      %v226 = vsel %vm224, %v225, %v221
      %v227 = vadd.s32 %v222, %v226
      %v228 = vadd.s32 %v227, 536870912
      %v229 = vshrl.u32 %v228, 30
      %v230 = vshll.u32 %v229, 30
      %v231 = vsub.s32 %v227, %v230
      %vm232 = vcmp.lt.s32.totalorder %v231, 0
      %v233 = vsub.s32 0, %v231
      %v234 = vsel %vm232, %v233, %v231
      %v235 = vclz %v234
      %v236 = vsub.s32 %v235, 2
      %vm237 = vcmp.gt.s32.totalorder 0, %v236
      %v238 = vsel %vm237, 0, %v236
      %v239 = vsub.s32 32, %v238
      %v240 = vshll.u32 %v231, %v238
      %v241 = vshrl.u32 %v223, %v239
      %v242 = vor.u32 %v240, %v241
      %v243 = vsub.s32 4294967266, %v238
      %v244 = vadd.s32 %v243, 127
      %v245 = vshll.u32 %v244, 23
      %v246 = vor.u32 4788187, %v245
      %v247 = vand.u32 2147483647, %v246
      %v249 = vcvt.s32.f32 %v242
      %v250 = vmul.f32 %v249, %v247
      %v251 = vxor.u32 %v250, 2147483648
      %v252 = vsel %vm169, %v251, %v250
      %v253 = vsub.s32 4, %v229
      %v254 = vsel %vm169, %v253, %v229
      %v255 = vsel %vm168, %v166, %v252
      %v256 = vsel %vm168, 0, %v254
      %v257 = vcosq.f32.pop %v255
      %v258 = vsinq.f32.pop %v255
      %vm259 = vweird.f32 %v166
      %v260 = vand.u32 %v256, 3
      %vm261 = vcmp.lt.s32.totalorder %v260, 2
      %vm262 = vcmp.eq.s32.totalorder %v260, 0
      %v263 = vxor.u32 %v258, 2147483648
      %v264 = vsel %vm262, %v257, %v263
      %vm265 = vcmp.eq.s32.totalorder %v260, 2
      %v266 = vxor.u32 %v257, 2147483648
      %v267 = vsel %vm265, %v266, %v258
      %v268 = vsel %vm261, %v264, %v267
      %v269 = vsel %vm259, nan, %v268
      %v270 = vmul.f32 %v269, 0.17677669
      %271 = vst [vmem:[#allocation7] sm:$0xff] %v270
    $region29: #{tpu_custom_call.1} parent=1 // pred_fallthru
      _
    // Predicated region
    $region30: #{tpu_custom_call.1} parent=1 // pred_check
      _
    $region31: #{tpu_custom_call.1} parent=1 // pred_check_branch
      %273 = sbr.rel (0) target = $region33
    $region32: #{tpu_custom_call.1} parent=1 // pred_region
      %s275 = ssub.s32 128, 128
      %276 = vsyncadd [#allocation4], %s275
      %s278 = sshll.u32 [#allocation7], 4
      %s279 = int_to_ptr.vmem [resolvable:$true] %s278
      %281 = dma.vmem_to_hbm [thread:$0]  %s279, 128, %s3, [#allocation4]
    $region33: #{tpu_custom_call.1} parent=1 // pred_fallthru
      _
    // Predicated region
    $region34: #{tpu_custom_call.1} parent=1 // pred_check
      _
    $region35: #{tpu_custom_call.1} parent=1 // pred_check_branch
      %283 = sbr.rel (0) target = $region37
    $region36: #{tpu_custom_call.1} parent=1 // pred_region
      %284 = dma.done [#allocation4], 128
    $region37: #{tpu_custom_call.1} parent=1 // pred_fallthru
      _
    %285 = vsyncpa [#allocation3], 1
    %286 = vsyncpa [#allocation6], 1
    %287 = vsyncpa [#allocation4], 1

</llo_original>
